<compile_context>
chip_gen: v7x
topology: tpu7x:2x2x1
jax: 0.10.0
libtpu: 0.0.40
codegen_flags: <defaults>
</compile_context>

<pallas_src>
import jax
import jax.numpy as jnp
from jax.experimental import pallas as pl
from jax.experimental.pallas import tpu as pltpu


def decoder_mlp_kernel(x_ref, w1_ref, b1_ref, w2_ref, b2_ref, out_ref):
    # Layer 1: bf16 x bf16 matmul on the MXU, f32 accumulate, f32 bias + ReLU.
    h = jnp.dot(x_ref[...], w1_ref[...], preferred_element_type=jnp.float32)
    h = jnp.maximum(h + b1_ref[...], 0.0)
    # Layer 2: keep h in f32 (v5e VPU has no bf16); upcast W2 for a plain f32 dot.
    o = jnp.dot(h, w2_ref[...].astype(jnp.float32),
                preferred_element_type=jnp.float32)
    o = jnp.maximum(o + b2_ref[...], 0.0)
    out_ref[...] = o.astype(out_ref.dtype)


def _round_up(x, m):
    return ((x + m - 1) // m) * m


def decoder_forward(embedding, w1, b1, w2, b2, *, batch_tile=128):
    """embedding: (B, noise_feature) f32 -> (B, message_length) f32.

    Weights are stored transposed vs. PyTorch nn.Linear:
      w1: (noise_feature, 256), w2: (256, message_length); biases are (1, dim).
    """
    B, F = embedding.shape
    H = w1.shape[1]
    M = w2.shape[1]
    assert w1.shape == (F, H) and b1.shape == (1, H)
    assert w2.shape == (H, M) and b2.shape == (1, M)

    # Lane-dense padding of the minor dims (multiples of 128).
    Fp = _round_up(F, 128)
    Hp = _round_up(H, 128)
    Mp = _round_up(M, 128)

    # Small batches: single un-gridded invocation.  Large batches: tile over B.
    use_grid = B > 2 * batch_tile
    Bp = _round_up(B, batch_tile if use_grid else 8)

    # Pad + cast matmul operands to bf16; keep biases f32.
    x_p = jnp.zeros((Bp, Fp), jnp.bfloat16).at[:B, :F].set(
        embedding.astype(jnp.bfloat16))
    w1_p = jnp.zeros((Fp, Hp), jnp.bfloat16).at[:F, :H].set(
        w1.astype(jnp.bfloat16))
    b1_p = jnp.zeros((1, Hp), jnp.float32).at[:, :H].set(b1.astype(jnp.float32))
    w2_p = jnp.zeros((Hp, Mp), jnp.bfloat16).at[:H, :M].set(
        w2.astype(jnp.bfloat16))
    b2_p = jnp.zeros((1, Mp), jnp.float32).at[:, :M].set(b2.astype(jnp.float32))

    out_shape = jax.ShapeDtypeStruct((Bp, Mp), jnp.float32)

    if not use_grid:
        # No grid, no pipeline bookkeeping: every array is one full VMEM block.
        out_p = pl.pallas_call(
            decoder_mlp_kernel,
            out_shape=out_shape,
            in_specs=[pl.BlockSpec(memory_space=pltpu.MemorySpace.VMEM)] * 5,
            out_specs=pl.BlockSpec(memory_space=pltpu.MemorySpace.VMEM),
        )(x_p, w1_p, b1_p, w2_p, b2_p)
    else:
        # Batch-tiled path: weights/biases stay VMEM-resident (constant index_map),
        # batch axis is "parallel" so v7x's two TensorCores split it.
        n_b = Bp // batch_tile
        out_p = pl.pallas_call(
            decoder_mlp_kernel,
            out_shape=out_shape,
            grid=(n_b,),
            in_specs=[
                pl.BlockSpec((batch_tile, Fp), lambda i: (i, 0)),
                pl.BlockSpec((Fp, Hp), lambda i: (0, 0)),
                pl.BlockSpec((1, Hp), lambda i: (0, 0)),
                pl.BlockSpec((Hp, Mp), lambda i: (0, 0)),
                pl.BlockSpec((1, Mp), lambda i: (0, 0)),
            ],
            out_specs=pl.BlockSpec((batch_tile, Mp), lambda i: (i, 0)),
            compiler_params=pltpu.CompilerParams(
                dimension_semantics=("parallel",)),
        )(x_p, w1_p, b1_p, w2_p, b2_p)

    return out_p[:B, :M]


def init_params(key, noise_feature, message_length, hidden=256):
    """Deterministic parameter init (shapes match nn.Linear in the module)."""
    k1, k2, k3, k4 = jax.random.split(key, 4)
    lim1 = 1.0 / jnp.sqrt(noise_feature)
    lim2 = 1.0 / jnp.sqrt(hidden)
    w1 = jax.random.uniform(k1, (noise_feature, hidden), jnp.float32, -lim1, lim1)
    b1 = jax.random.uniform(k2, (1, hidden), jnp.float32, -lim1, lim1)
    w2 = jax.random.uniform(k3, (hidden, message_length), jnp.float32, -lim2, lim2)
    b2 = jax.random.uniform(k4, (1, message_length), jnp.float32, -lim2, lim2)
    return w1, b1, w2, b2


def _reference(embedding, w1, b1, w2, b2):
    # Pure-JAX f32 reference (same math as the PyTorch forward).
    return jnp.maximum(jnp.maximum(embedding @ w1 + b1, 0.0) @ w2 + b2, 0.0)


if __name__ == "__main__":
    # Small config consistent with the module's forward:
    #   config.noise_feature = 32, config.message_length = 32, batch = 8
    B, NOISE_FEATURE, MESSAGE_LENGTH = 8, 32, 32

    key = jax.random.PRNGKey(0)
    k_x, k_p, k_x2 = jax.random.split(key, 3)
    embedding = jax.random.normal(k_x, (B, NOISE_FEATURE), jnp.float32)
    w1, b1, w2, b2 = init_params(k_p, NOISE_FEATURE, MESSAGE_LENGTH)

    # --- small-batch (gridless) path ---
    out = jax.block_until_ready(decoder_forward(embedding, w1, b1, w2, b2))
    ref = _reference(embedding, w1, b1, w2, b2)
    assert out.shape == (B, MESSAGE_LENGTH)
    # bf16 matmul operands (f32 accumulation) -> relaxed tolerance vs f32 reference.
    assert jnp.allclose(out, ref, atol=2e-2, rtol=2e-2)

    # --- large-batch (gridded, batch-parallel) path ---
    B2 = 512
    embedding2 = jax.random.normal(k_x2, (B2, NOISE_FEATURE), jnp.float32)
    out2 = jax.block_until_ready(decoder_forward(embedding2, w1, b1, w2, b2))
    ref2 = _reference(embedding2, w1, b1, w2, b2)
    assert out2.shape == (B2, MESSAGE_LENGTH)
    assert jnp.allclose(out2, ref2, atol=2e-2, rtol=2e-2)

    print("KERNEL_OK")
</pallas_src>

<mosaic_0001>
module attributes {stable_mosaic.version = 11 : i64} {
  func.func @decoder_mlp_kernel(%arg0: memref<8x128xbf16, #tpu.memory_space<vmem>>, %arg1: memref<128x256xbf16, #tpu.memory_space<vmem>>, %arg2: memref<1x256xf32, #tpu.memory_space<vmem>>, %arg3: memref<256x128xbf16, #tpu.memory_space<vmem>>, %arg4: memref<1x128xf32, #tpu.memory_space<vmem>>, %arg5: memref<8x128xf32, #tpu.memory_space<vmem>>) attributes {dimension_semantics = [], scalar_prefetch = 0 : i64, scratch_operands = 0 : i64, tpu.core_type = #tpu.core_type<tc>} {
    %c0 = arith.constant 0 : index
    %c0_0 = arith.constant 0 : index
    %0 = vector.load %arg0[%c0, %c0_0] : memref<8x128xbf16, #tpu.memory_space<vmem>>, vector<8x128xbf16>
    %c0_1 = arith.constant 0 : index
    %c0_2 = arith.constant 0 : index
    %1 = vector.load %arg1[%c0_1, %c0_2] : memref<128x256xbf16, #tpu.memory_space<vmem>>, vector<128x256xbf16>
    %cst = arith.constant dense<0.000000e+00> : vector<8x256xf32>
    %2 = tpu.matmul %0, %1, %cst {dimension_numbers = #tpu.dot_dimension_numbers<[1], [0], [0], [1], [0, 0, 1, 1], [], []>} : vector<8x128xbf16>, vector<128x256xbf16>, vector<8x256xf32> -> vector<8x256xf32>
    %c0_3 = arith.constant 0 : index
    %c0_4 = arith.constant 0 : index
    %3 = vector.load %arg2[%c0_3, %c0_4] : memref<1x256xf32, #tpu.memory_space<vmem>>, vector<1x256xf32>
    %4 = vector.broadcast %3 : vector<1x256xf32> to vector<8x256xf32>
    %5 = arith.addf %2, %4 : vector<8x256xf32>
    %cst_5 = arith.constant 0.000000e+00 : f32
    %6 = vector.broadcast %cst_5 : f32 to vector<8x256xf32>
    %7 = arith.maximumf %5, %6 : vector<8x256xf32>
    %c0_6 = arith.constant 0 : index
    %c0_7 = arith.constant 0 : index
    %8 = vector.load %arg3[%c0_6, %c0_7] : memref<256x128xbf16, #tpu.memory_space<vmem>>, vector<256x128xbf16>
    %9 = arith.extf %8 : vector<256x128xbf16> to vector<256x128xf32>
    %cst_8 = arith.constant dense<0.000000e+00> : vector<8x128xf32>
    %10 = tpu.matmul %7, %9, %cst_8 {dimension_numbers = #tpu.dot_dimension_numbers<[1], [0], [0], [1], [0, 0, 1, 1], [], []>} : vector<8x256xf32>, vector<256x128xf32>, vector<8x128xf32> -> vector<8x128xf32>
    %c0_9 = arith.constant 0 : index
    %c0_10 = arith.constant 0 : index
    %11 = vector.load %arg4[%c0_9, %c0_10] : memref<1x128xf32, #tpu.memory_space<vmem>>, vector<1x128xf32>
    %12 = vector.broadcast %11 : vector<1x128xf32> to vector<8x128xf32>
    %13 = arith.addf %10, %12 : vector<8x128xf32>
    %cst_11 = arith.constant 0.000000e+00 : f32
    %14 = vector.broadcast %cst_11 : f32 to vector<8x128xf32>
    %15 = arith.maximumf %13, %14 : vector<8x128xf32>
    %c0_12 = arith.constant 0 : index
    %c0_13 = arith.constant 0 : index
    %16 = vector.load %arg5[%c0_12, %c0_13] : memref<8x128xf32, #tpu.memory_space<vmem>>, vector<8x128xf32>
    tpu.vector_store %arg5[%c0_12, %c0_13], %15 {strides = array<i32>} : memref<8x128xf32, #tpu.memory_space<vmem>>, vector<8x128xf32>,
    return
  }
}

</mosaic_0001>

<llo_original>
// kernel: tpu_custom_call.1
$region0: #{tpu_custom_call.1}
  #allocation0 [shape = 'u32[]', space=smem, size = 0x4, offset = 0x4, fixed_abs, tag = 'smem constant byte address 0x4 - core index']
  #allocation1 [shape = 'u32[144,128]{1,0:T(1,128)}', space=vmem, size = 0x12000, scoped, tag = 'internal scratch']
  %s0 = inlined_call_operand.hbm [shape: bf16[8,128], index: 0, kind: input, shape index: {}]
  %s1 = inlined_call_operand.hbm [shape: bf16[128,256], index: 1, kind: input, shape index: {}]
  %s2 = inlined_call_operand.vmem [shape: f32[1,256], index: 2, kind: input, shape index: {}]
  %s3 = inlined_call_operand.hbm [shape: bf16[256,128], index: 3, kind: input, shape index: {}]
  %s4 = inlined_call_operand.vmem [shape: f32[1,128], index: 4, kind: input, shape index: {}]
  %s5 = inlined_call_operand.hbm [shape: f32[8,128], index: 5, kind: output, shape index: {}]
  %s6 = sld [smem:[#allocation0]]
  $region42: #{tpu_custom_call.1} parent=0
    _
  %s8 = ssub.s32 1, %s6
  %s9 = scalar_select 0, %s8, %s6
  $region1: #{tpu_custom_call.1} parent=0
    #allocation2 [shape = 'u8[2048]{0}', space=vmem, size = 0x800, scoped, tag = 'input window, operand 0, single buffered']
    #allocation3 [shape = 's32[1]{0}', space=sflag, size = 0x4, scoped, tag = 'scoped memory for tpu_custom_call.1']
    #allocation4 [shape = 's32[1]{0}', space=sflag, size = 0x4, scoped, tag = 'scoped memory for tpu_custom_call.1']
    #allocation5 [shape = 'u8[65536]{0}', space=vmem, size = 0x10000, scoped, tag = 'input window, operand 1, single buffered']
    #allocation6 [shape = 's32[1]{0}', space=sflag, size = 0x4, scoped, tag = 'scoped memory for tpu_custom_call.1']
    #allocation7 [shape = 'u8[65536]{0}', space=vmem, size = 0x10000, scoped, tag = 'input window, operand 3, single buffered']
    #allocation8 [shape = 'u8[4096]{0}', space=vmem, size = 0x1000, scoped, tag = 'output window, operand 0, single buffered']
    %10 = vsyncpa [#allocation3], 0
    %11 = vsyncpa [#allocation6], 0
    %12 = vsyncpa [#allocation4], 0
    // Predicated region
    $region2: #{tpu_custom_call.1} parent=1 // pred_check
      _
    $region3: #{tpu_custom_call.1} parent=1 // pred_check_branch
      %14 = sbr.rel (0) target = $region5
    $region4: #{tpu_custom_call.1} parent=1 // pred_region
      %s16 = ssub.s32 64, 64
      %17 = vsyncadd [#allocation3], %s16
      %s19 = sshll.u32 [#allocation2], 4
      %s20 = int_to_ptr.vmem [resolvable:$true] %s19
      %22 = dma.hbm_to_vmem [thread:$0]  %s0, 64, %s20, [#allocation3]
    $region5: #{tpu_custom_call.1} parent=1 // pred_fallthru
      _
    // Predicated region
    $region6: #{tpu_custom_call.1} parent=1 // pred_check
      _
    $region7: #{tpu_custom_call.1} parent=1 // pred_check_branch
      %24 = sbr.rel (0) target = $region9
    $region8: #{tpu_custom_call.1} parent=1 // pred_region
      %s26 = ssub.s32 2048, 2048
      %27 = vsyncadd [#allocation6], %s26
      %s28 = sshll.u32 [#allocation5], 4
      %s29 = int_to_ptr.vmem [resolvable:$true] %s28
      %34 = dma.hbm_to_vmem [thread:$0]  %s1, 2048, %s29, [#allocation6], 128, 128, 8
    $region9: #{tpu_custom_call.1} parent=1 // pred_fallthru
      _
    // Predicated region
    $region10: #{tpu_custom_call.1} parent=1 // pred_check
      _
    $region11: #{tpu_custom_call.1} parent=1 // pred_check_branch
      %36 = sbr.rel (0) target = $region13
    $region12: #{tpu_custom_call.1} parent=1 // pred_region
      _
    $region13: #{tpu_custom_call.1} parent=1 // pred_fallthru
      _
    // Predicated region
    $region14: #{tpu_custom_call.1} parent=1 // pred_check
      _
    $region15: #{tpu_custom_call.1} parent=1 // pred_check_branch
      %38 = sbr.rel (0) target = $region17
    $region16: #{tpu_custom_call.1} parent=1 // pred_region
      %s40 = ssub.s32 2048, 2048
      %41 = vsyncadd [#allocation6], %s40
      %s42 = sshll.u32 [#allocation7], 4
      %s43 = int_to_ptr.vmem [resolvable:$true] %s42
      %48 = dma.hbm_to_vmem [thread:$0]  %s3, 2048, %s43, [#allocation6], 64, 64, 4
    $region17: #{tpu_custom_call.1} parent=1 // pred_fallthru
      _
    // Predicated region
    $region18: #{tpu_custom_call.1} parent=1 // pred_check
      _
    $region19: #{tpu_custom_call.1} parent=1 // pred_check_branch
      %50 = sbr.rel (0) target = $region21
    $region20: #{tpu_custom_call.1} parent=1 // pred_region
      _
    $region21: #{tpu_custom_call.1} parent=1 // pred_fallthru
      _
    // Predicated region
    $region22: #{tpu_custom_call.1} parent=1 // pred_check
      _
    $region23: #{tpu_custom_call.1} parent=1 // pred_check_branch
      %52 = sbr.rel (0) target = $region25
    $region24: #{tpu_custom_call.1} parent=1 // pred_region
      %53 = dma.done [#allocation3], 64
    $region25: #{tpu_custom_call.1} parent=1 // pred_fallthru
      _
    // Predicated region
    $region26: #{tpu_custom_call.1} parent=1 // pred_check
      _
    $region27: #{tpu_custom_call.1} parent=1 // pred_check_branch
      %55 = sbr.rel (0) target = $region29
    $region28: #{tpu_custom_call.1} parent=1 // pred_region
      %56 = dma.done [#allocation6], 2048
    $region29: #{tpu_custom_call.1} parent=1 // pred_fallthru
      _
    // Predicated region
    $region30: #{tpu_custom_call.1} parent=1 // pred_check
      _
    $region31: #{tpu_custom_call.1} parent=1 // pred_check_branch
      %58 = sbr.rel (0) target = $region33
    $region32: #{tpu_custom_call.1} parent=1 // pred_region
      %59 = dma.done [#allocation6], 2048
    $region33: #{tpu_custom_call.1} parent=1 // pred_fallthru
      _
    %v61 = vld [vmem:[#allocation2] sm:$0xf]
    %v62 = vld [vmem:[#allocation5] sm:$0xff]
    %v63 = vld [vmem:[#allocation5 + $0x8] sm:$0xff]
    %v64 = vld [vmem:[#allocation5 + $0x10] sm:$0xff]
    %v65 = vld [vmem:[#allocation5 + $0x18] sm:$0xff]
    %v66 = vld [vmem:[#allocation5 + $0x20] sm:$0xff]
    %v67 = vld [vmem:[#allocation5 + $0x28] sm:$0xff]
    %v68 = vld [vmem:[#allocation5 + $0x30] sm:$0xff]
    %v69 = vld [vmem:[#allocation5 + $0x38] sm:$0xff]
    %v70 = vld [vmem:[#allocation5 + $0x40] sm:$0xff]
    %v71 = vld [vmem:[#allocation5 + $0x48] sm:$0xff]
    %v72 = vld [vmem:[#allocation5 + $0x50] sm:$0xff]
    %v73 = vld [vmem:[#allocation5 + $0x58] sm:$0xff]
    %v74 = vld [vmem:[#allocation5 + $0x60] sm:$0xff]
    %v75 = vld [vmem:[#allocation5 + $0x68] sm:$0xff]
    %v76 = vld [vmem:[#allocation5 + $0x70] sm:$0xff]
    %v77 = vld [vmem:[#allocation5 + $0x78] sm:$0xff]
    %v78 = vld [vmem:[%s2] sm:$0x3]
    %v80 = vlaneseq
    %v81 = vshrl.u32 %v80, 7
    %v82 = vsub.s32 0, %v81
    %v83 = vrot.slane %v78, %v82
    %v84 = vlaneseq
    %v85 = vshrl.u32 %v84, 7
    %v86 = vsub.s32 1, %v85
    %v87 = vrot.slane %v78, %v86
    %v106 = vunpack.c.l.b16 %v62
    %v107 = vunpack.c.h.b16 %v62
    %v108 = vunpack.c.l.b16 %v63
    %v109 = vunpack.c.h.b16 %v63
    %v110 = vunpack.c.l.b16 %v64
    %v111 = vunpack.c.h.b16 %v64
    %v112 = vunpack.c.l.b16 %v65
    %v113 = vunpack.c.h.b16 %v65
    %v114 = vunpack.c.l.b16 %v66
    %v115 = vunpack.c.h.b16 %v66
    %v116 = vunpack.c.l.b16 %v67
    %v117 = vunpack.c.h.b16 %v67
    %v118 = vunpack.c.l.b16 %v68
    %v119 = vunpack.c.h.b16 %v68
    %v120 = vunpack.c.l.b16 %v69
    %v121 = vunpack.c.h.b16 %v69
    %v122 = vunpack.c.l.b16 %v70
    %v123 = vunpack.c.h.b16 %v70
    %v124 = vunpack.c.l.b16 %v71
    %v125 = vunpack.c.h.b16 %v71
    %v126 = vunpack.c.l.b16 %v72
    %v127 = vunpack.c.h.b16 %v72
    %v128 = vunpack.c.l.b16 %v73
    %v129 = vunpack.c.h.b16 %v73
    %v130 = vunpack.c.l.b16 %v74
    %v131 = vunpack.c.h.b16 %v74
    %v132 = vunpack.c.l.b16 %v75
    %v133 = vunpack.c.h.b16 %v75
    %v134 = vunpack.c.l.b16 %v76
    %v135 = vunpack.c.h.b16 %v76
    %v136 = vunpack.c.l.b16 %v77
    %v137 = vunpack.c.h.b16 %v77
    %v138 = vpack.c.b16 %v108, %v106
    %v139 = vpack.c.b16 %v109, %v107
    %v140 = vpack.c.b16 %v112, %v110
    %v141 = vpack.c.b16 %v113, %v111
    %v142 = vpack.c.b16 %v116, %v114
    %v143 = vpack.c.b16 %v117, %v115
    %v144 = vpack.c.b16 %v120, %v118
    %v145 = vpack.c.b16 %v121, %v119
    %v146 = vpack.c.b16 %v124, %v122
    %v147 = vpack.c.b16 %v125, %v123
    %v148 = vpack.c.b16 %v128, %v126
    %v149 = vpack.c.b16 %v129, %v127
    %v150 = vpack.c.b16 %v132, %v130
    %v151 = vpack.c.b16 %v133, %v131
    %v152 = vpack.c.b16 %v136, %v134
    %v153 = vpack.c.b16 %v137, %v135
    %170 = vmatprep.subr.bf16.mxu0 %v139
    %171 = vmatpush1.bf16.msra.mxu0 %v138
    %172 = vmatprep.subr.bf16.mxu0 %v141
    %173 = vmatpush1.bf16.msra.mxu0 %v140
    %174 = vmatprep.subr.bf16.mxu0 %v143
    %175 = vmatpush1.bf16.msra.mxu0 %v142
    %176 = vmatprep.subr.bf16.mxu0 %v145
    %177 = vmatpush1.bf16.msra.mxu0 %v144
    %178 = vmatprep.subr.bf16.mxu0 %v147
    %179 = vmatpush1.bf16.msra.mxu0 %v146
    %180 = vmatprep.subr.bf16.mxu0 %v149
    %181 = vmatpush1.bf16.msra.mxu0 %v148
    %182 = vmatprep.subr.bf16.mxu0 %v151
    %183 = vmatpush1.bf16.msra.mxu0 %v150
    %184 = vmatprep.subr.bf16.mxu0 %v153
    %185 = vmatpush1.bf16.msra.mxu0 %v152
    %186 = vmatprep.subr.bf16.mxu0 0
    %187 = vmatpush1.bf16.msra.mxu0 0
    %188 = vmatprep.subr.bf16.mxu0 0
    %189 = vmatpush1.bf16.msra.mxu0 0
    %190 = vmatprep.subr.bf16.mxu0 0
    %191 = vmatpush1.bf16.msra.mxu0 0
    %192 = vmatprep.subr.bf16.mxu0 0
    %193 = vmatpush1.bf16.msra.mxu0 0
    %194 = vmatprep.subr.bf16.mxu0 0
    %195 = vmatpush1.bf16.msra.mxu0 0
    %196 = vmatprep.subr.bf16.mxu0 0
    %197 = vmatpush1.bf16.msra.mxu0 0
    %198 = vmatprep.subr.bf16.mxu0 0
    %199 = vmatpush1.bf16.msra.mxu0 0
    %200 = vmatprep.subr.bf16.mxu0 0
    %201 = vmatpush1.bf16.msra.mxu0 0
    %202 = vmatprep.mubr.bf16.mxu0 0
    %203 = vmatmul.mubr.bf16.gmra.mrb[0].mxu0 %v61
    %v204 = vpop.f32.mrb[0].mxu0
    %v205 = vadd.f32 %v83, %v204
    %v206 = vpop.f32.mrb[0].mxu0
    %v207 = vadd.f32 %v87, %v206
    %v208 = vpop.f32.mrb[0].mxu0
    %v209 = vpop.f32.mrb[0].mxu0
    %210 = vdwg.mxu0
    %v211 = vmax.f32 %v205, 0.0
    %v212 = vmax.f32 %v207, 0.0
    %v213 = vld [vmem:[#allocation7] sm:$0xf]
    %v214 = vld [vmem:[#allocation7 + $0x4] sm:$0xf]
    %v215 = vld [vmem:[#allocation7 + $0x8] sm:$0xf]
    %v216 = vld [vmem:[#allocation7 + $0xc] sm:$0xf]
    %v217 = vld [vmem:[#allocation7 + $0x10] sm:$0xf]
    %v218 = vld [vmem:[#allocation7 + $0x14] sm:$0xf]
    %v219 = vld [vmem:[#allocation7 + $0x18] sm:$0xf]
    %v220 = vld [vmem:[#allocation7 + $0x1c] sm:$0xf]
    %v221 = vld [vmem:[#allocation7 + $0x20] sm:$0xf]
    %v222 = vld [vmem:[#allocation7 + $0x24] sm:$0xf]
    %v223 = vld [vmem:[#allocation7 + $0x28] sm:$0xf]
    %v224 = vld [vmem:[#allocation7 + $0x2c] sm:$0xf]
    %v225 = vld [vmem:[#allocation7 + $0x30] sm:$0xf]
    %v226 = vld [vmem:[#allocation7 + $0x34] sm:$0xf]
    %v227 = vld [vmem:[#allocation7 + $0x38] sm:$0xf]
    %v228 = vld [vmem:[#allocation7 + $0x3c] sm:$0xf]
    %v229 = vld [vmem:[#allocation7 + $0x40] sm:$0xf]
    %v230 = vld [vmem:[#allocation7 + $0x44] sm:$0xf]
    %v231 = vld [vmem:[#allocation7 + $0x48] sm:$0xf]
    %v232 = vld [vmem:[#allocation7 + $0x4c] sm:$0xf]
    %v233 = vld [vmem:[#allocation7 + $0x50] sm:$0xf]
    %v234 = vld [vmem:[#allocation7 + $0x54] sm:$0xf]
    %v235 = vld [vmem:[#allocation7 + $0x58] sm:$0xf]
    %v236 = vld [vmem:[#allocation7 + $0x5c] sm:$0xf]
    %v237 = vld [vmem:[#allocation7 + $0x60] sm:$0xf]
    %v238 = vld [vmem:[#allocation7 + $0x64] sm:$0xf]
    %v239 = vld [vmem:[#allocation7 + $0x68] sm:$0xf]
    %v240 = vld [vmem:[#allocation7 + $0x6c] sm:$0xf]
    %v241 = vld [vmem:[#allocation7 + $0x70] sm:$0xf]
    %v242 = vld [vmem:[#allocation7 + $0x74] sm:$0xf]
    %v243 = vld [vmem:[#allocation7 + $0x78] sm:$0xf]
    %v244 = vld [vmem:[#allocation7 + $0x7c] sm:$0xf]
    %v245 = vunpack.c.l.bf16 %v213
    %v246 = vunpack.c.l.bf16 %v214
    %v247 = vunpack.c.l.bf16 %v215
    %v248 = vunpack.c.l.bf16 %v216
    %v249 = vunpack.c.l.bf16 %v217
    %v250 = vunpack.c.l.bf16 %v218
    %v251 = vunpack.c.l.bf16 %v219
    %v252 = vunpack.c.l.bf16 %v220
    %v253 = vunpack.c.l.bf16 %v221
    %v254 = vunpack.c.l.bf16 %v222
    %v255 = vunpack.c.l.bf16 %v223
    %v256 = vunpack.c.l.bf16 %v224
    %v257 = vunpack.c.l.bf16 %v225
    %v258 = vunpack.c.l.bf16 %v226
    %v259 = vunpack.c.l.bf16 %v227
    %v260 = vunpack.c.l.bf16 %v228
    %v261 = vunpack.c.l.bf16 %v229
    %v262 = vunpack.c.l.bf16 %v230
    %v263 = vunpack.c.l.bf16 %v231
    %v264 = vunpack.c.l.bf16 %v232
    %v265 = vunpack.c.l.bf16 %v233
    %v266 = vunpack.c.l.bf16 %v234
    %v267 = vunpack.c.l.bf16 %v235
    %v268 = vunpack.c.l.bf16 %v236
    %v269 = vunpack.c.l.bf16 %v237
    %v270 = vunpack.c.l.bf16 %v238
    %v271 = vunpack.c.l.bf16 %v239
    %v272 = vunpack.c.l.bf16 %v240
    %v273 = vunpack.c.l.bf16 %v241
    %v274 = vunpack.c.l.bf16 %v242
    %v275 = vunpack.c.l.bf16 %v243
    %v276 = vunpack.c.l.bf16 %v244
    %v277 = vld [vmem:[%s4] sm:$0x1]
    %v279 = vlaneseq
    %v280 = vshrl.u32 %v279, 7
    %v281 = vsub.s32 0, %v280
    %v282 = vrot.slane %v277, %v281
    %284 = vmatprep.subr.mxu0 0.0
    %285 = vmatpush1.msra.mxu0 %v245
    %286 = vmatprep.subr.mxu0 0.0
    %287 = vmatpush1.msra.mxu0 %v246
    %288 = vmatprep.subr.mxu0 0.0
    %289 = vmatpush1.msra.mxu0 %v247
    %290 = vmatprep.subr.mxu0 0.0
    %291 = vmatpush1.msra.mxu0 %v248
    %292 = vmatprep.subr.mxu0 0.0
    %293 = vmatpush1.msra.mxu0 %v249
    %294 = vmatprep.subr.mxu0 0.0
    %295 = vmatpush1.msra.mxu0 %v250
    %296 = vmatprep.subr.mxu0 0.0
    %297 = vmatpush1.msra.mxu0 %v251
    %298 = vmatprep.subr.mxu0 0.0
    %299 = vmatpush1.msra.mxu0 %v252
    %300 = vmatprep.subr.mxu0 0.0
    %301 = vmatpush1.msra.mxu0 %v253
    %302 = vmatprep.subr.mxu0 0.0
    %303 = vmatpush1.msra.mxu0 %v254
    %304 = vmatprep.subr.mxu0 0.0
    %305 = vmatpush1.msra.mxu0 %v255
    %306 = vmatprep.subr.mxu0 0.0
    %307 = vmatpush1.msra.mxu0 %v256
    %308 = vmatprep.subr.mxu0 0.0
    %309 = vmatpush1.msra.mxu0 %v257
    %310 = vmatprep.subr.mxu0 0.0
    %311 = vmatpush1.msra.mxu0 %v258
    %312 = vmatprep.subr.mxu0 0.0
    %313 = vmatpush1.msra.mxu0 %v259
    %314 = vmatprep.subr.mxu0 0.0
    %315 = vmatpush1.msra.mxu0 %v260
    %316 = vmatprep.subr.mxu0 0.0
    %317 = vmatpush1.msra.mxu0 %v261
    %318 = vmatprep.subr.mxu0 0.0
    %319 = vmatpush1.msra.mxu0 %v262
    %320 = vmatprep.subr.mxu0 0.0
    %321 = vmatpush1.msra.mxu0 %v263
    %322 = vmatprep.subr.mxu0 0.0
    %323 = vmatpush1.msra.mxu0 %v264
    %324 = vmatprep.subr.mxu0 0.0
    %325 = vmatpush1.msra.mxu0 %v265
    %326 = vmatprep.subr.mxu0 0.0
    %327 = vmatpush1.msra.mxu0 %v266
    %328 = vmatprep.subr.mxu0 0.0
    %329 = vmatpush1.msra.mxu0 %v267
    %330 = vmatprep.subr.mxu0 0.0
    %331 = vmatpush1.msra.mxu0 %v268
    %332 = vmatprep.subr.mxu0 0.0
    %333 = vmatpush1.msra.mxu0 %v269
    %334 = vmatprep.subr.mxu0 0.0
    %335 = vmatpush1.msra.mxu0 %v270
    %336 = vmatprep.subr.mxu0 0.0
    %337 = vmatpush1.msra.mxu0 %v271
    %338 = vmatprep.subr.mxu0 0.0
    %339 = vmatpush1.msra.mxu0 %v272
    %340 = vmatprep.subr.mxu0 0.0
    %341 = vmatpush1.msra.mxu0 %v273
    %342 = vmatprep.subr.mxu0 0.0
    %343 = vmatpush1.msra.mxu0 %v274
    %344 = vmatprep.subr.mxu0 0.0
    %345 = vmatpush1.msra.mxu0 %v275
    %346 = vmatprep.subr.mxu0 0.0
    %347 = vmatpush1.msra.mxu0 %v276
    %348 = vmatprep.mubr.f32.mxu0 %v212
    %349 = vmatmul.mubr.f32.gmra.mrb[0].mxu0 %v211
    %v350 = vpop.f32.mrb[0].mxu0
    %v351 = vadd.f32 %v282, %v350
    %v352 = vpop.f32.mrb[0].mxu0
    %353 = vdwg.mxu0
    %v354 = vmax.f32 %v351, 0.0
    %355 = vst [vmem:[#allocation8] sm:$0xff] %v354
    // Predicated region
    $region34: #{tpu_custom_call.1} parent=1 // pred_check
      _
    $region35: #{tpu_custom_call.1} parent=1 // pred_check_branch
      %357 = sbr.rel (0) target = $region37
    $region36: #{tpu_custom_call.1} parent=1 // pred_region
      %s359 = ssub.s32 128, 128
      %360 = vsyncadd [#allocation4], %s359
      %s362 = sshll.u32 [#allocation8], 4
      %s363 = int_to_ptr.vmem [resolvable:$true] %s362
      %365 = dma.vmem_to_hbm [thread:$0]  %s363, 128, %s5, [#allocation4]
    $region37: #{tpu_custom_call.1} parent=1 // pred_fallthru
      _
    // Predicated region
    $region38: #{tpu_custom_call.1} parent=1 // pred_check
      _
    $region39: #{tpu_custom_call.1} parent=1 // pred_check_branch
      %367 = sbr.rel (0) target = $region41
    $region40: #{tpu_custom_call.1} parent=1 // pred_region
      %368 = dma.done [#allocation4], 128
    $region41: #{tpu_custom_call.1} parent=1 // pred_fallthru
      _
    %369 = vsyncpa [#allocation3], 1
    %370 = vsyncpa [#allocation6], 1
    %371 = vsyncpa [#allocation4], 1

</llo_original>
